<compile_context>
chip_gen: v7x
topology: tpu7x:2x2x1
jax: 0.10.0
libtpu: 0.0.40
codegen_flags: <defaults>
</compile_context>

<pallas_src>
import jax
import jax.numpy as jnp
from jax.experimental import pallas as pl
from jax.experimental.pallas import tpu as pltpu

NUM_CLASSES = 3
_MAX_TILE_B = 2048


def _mlp_softmax_kernel(x_ref,
                        w1_ref, b1_ref,
                        w2_ref, b2_ref,
                        w3_ref, b3_ref,
                        wo_ref, bo_ref,
                        out_ref):
    """x_ref: (TILE_B, F) f32.  Weights are bf16, biases f32.
    out_ref: (TILE_B, NUM_CLASSES) f32 softmax probabilities."""

    def dense(h_bf16, w_ref, b_ref):
        # bf16 MXU operands, f32 accumulation; bias add stays in f32.
        acc = jnp.dot(h_bf16, w_ref[...], preferred_element_type=jnp.float32)
        return acc + b_ref[...]

    h = x_ref[...].astype(jnp.bfloat16)
    h = jnp.maximum(dense(h, w1_ref, b1_ref), 0.0).astype(jnp.bfloat16)   # F   -> 128
    h = jnp.maximum(dense(h, w2_ref, b2_ref), 0.0).astype(jnp.bfloat16)   # 128 -> 64
    h = jnp.maximum(dense(h, w3_ref, b3_ref), 0.0).astype(jnp.bfloat16)   # 64  -> 32

    logits = dense(h, wo_ref, bo_ref)                                     # 32 -> 3 (f32)

    m = jnp.max(logits, axis=-1, keepdims=True)
    e = jnp.exp(logits - m)
    denom = jnp.sum(e, axis=-1, keepdims=True)
    out_ref[...] = (e / denom).astype(out_ref.dtype)                      # exact normalize


def _round_up(x, m):
    return ((x + m - 1) // m) * m


def _pick_tile_b(batch, feat):
    # VMEM budget for the double-buffered (tile_b, F) f32 activation stream —
    # tiny now that only the last timestep is fetched, so the real limiter is
    # keeping enough grid steps for v7x's two TensorCores.
    budget = 8 * 1024 * 1024
    cap = max(8, ((budget // (2 * feat * 4)) // 8) * 8)
    cap = min(cap, _MAX_TILE_B)
    # >= 4 grid steps when the batch allows it (megacore sharding on v7x;
    # measured no-op on single-TC v5e/v6e).
    per_core = _round_up(pl.cdiv(batch, 4), 8)
    return max(8, min(cap, per_core))


@jax.jit
def trading_network_forward(x, params):
    """x: (B, S, F) float32.  Returns softmax probabilities (B, 3)."""
    B, S, F = x.shape
    (w1, b1), (w2, b2), (w3, b3), (wo, bo) = params
    n_classes = wo.shape[1]

    # Only the last timestep is ever used; slice it before the kernel so the
    # pipeline streams (tile_b, F) blocks instead of (tile_b, S, F).
    # TODO(synk): a Squeezed time-axis BlockSpec could fuse this slice into the
    # kernel and save the one extra B*F pass this XLA slice costs.
    x_last = x[:, -1, :]

    # Pre-cast weights to bf16 once (biases stay f32).
    w1b, w2b, w3b, wob = (w.astype(jnp.bfloat16) for w in (w1, w2, w3, wo))

    tile_b = _pick_tile_b(B, F)
    grid_b = pl.cdiv(B, tile_b)          # ragged last block handled by Pallas

    # Constant index_map -> block fetched once, stays VMEM-resident.
    resident = lambda a: pl.BlockSpec(a.shape, lambda i: (0,) * a.ndim)

    out = pl.pallas_call(
        _mlp_softmax_kernel,
        out_shape=jax.ShapeDtypeStruct((B, n_classes), jnp.float32),
        grid=(grid_b,),
        in_specs=[
            pl.BlockSpec((tile_b, F), lambda i: (i, 0)),     # activations
            resident(w1b), resident(b1),
            resident(w2b), resident(b2),
            resident(w3b), resident(b3),
            resident(wob), resident(bo),
        ],
        out_specs=pl.BlockSpec((tile_b, n_classes), lambda i: (i, 0)),
        compiler_params=pltpu.CompilerParams(
            dimension_semantics=("parallel",),               # v7x megacore
        ),
    )(x_last, w1b, b1, w2b, b2, w3b, b3, wob, bo)

    return out


def init_params(key, feature_dim, layer_config=(128, 64, 32), num_classes=3):
    """Deterministic init.  Weights stored as (in_dim, out_dim), biases (1, out_dim)."""
    params = []
    in_dim = feature_dim
    for out_dim in list(layer_config) + [num_classes]:
        kw, kb, key = jax.random.split(key, 3)
        bound = 1.0 / jnp.sqrt(jnp.float32(in_dim))
        w = jax.random.uniform(kw, (in_dim, out_dim), jnp.float32, -bound, bound)
        b = jax.random.uniform(kb, (1, out_dim), jnp.float32, -bound, bound)
        params.append((w, b))
        in_dim = out_dim
    return params


def _reference_forward(x, params):
    h = x[:, -1, :]
    for w, b in params[:-1]:
        h = jnp.maximum(h @ w + b, 0.0)
    wo, bo = params[-1]
    return jax.nn.softmax(h @ wo + bo, axis=1)


if __name__ == "__main__":
    key = jax.random.PRNGKey(0)
    k_x, k_p = jax.random.split(key)

    batch, seq, feat = 8, 8, 32          # input_shape = (seq, feat)
    x = jax.random.normal(k_x, (batch, seq, feat), dtype=jnp.float32)
    params = init_params(k_p, feat)

    probs = jax.block_until_ready(trading_network_forward(x, params))
    ref = jax.block_until_ready(_reference_forward(x, params))

    assert probs.shape == (batch, NUM_CLASSES)
    row_sums = jnp.sum(probs, axis=1)
    # Exact f32 normalization -> tight row-sum check; bf16 matmuls -> loose
    # elementwise tolerance vs the f32 reference.
    assert bool(jnp.all(jnp.abs(row_sums - 1.0) < 1e-5))
    assert bool(jnp.max(jnp.abs(probs - ref)) < 3e-2)

    print("KERNEL_OK")
</pallas_src>

<mosaic_0001>
module attributes {stable_mosaic.version = 11 : i64} {
  func.func @_mlp_softmax_kernel(%arg0: i32, %arg1: memref<8x32xf32, #tpu.memory_space<vmem>>, %arg2: memref<32x128xbf16, #tpu.memory_space<vmem>>, %arg3: memref<1x128xf32, #tpu.memory_space<vmem>>, %arg4: memref<128x64xbf16, #tpu.memory_space<vmem>>, %arg5: memref<1x64xf32, #tpu.memory_space<vmem>>, %arg6: memref<64x32xbf16, #tpu.memory_space<vmem>>, %arg7: memref<1x32xf32, #tpu.memory_space<vmem>>, %arg8: memref<32x3xbf16, #tpu.memory_space<vmem>>, %arg9: memref<1x3xf32, #tpu.memory_space<vmem>>, %arg10: memref<8x3xf32, #tpu.memory_space<vmem>>) attributes {dimension_semantics = [#tpu.dimension_semantics<parallel>], iteration_bounds = array<i64: 1>, scalar_prefetch = 0 : i64, scratch_operands = 0 : i64, tpu.core_type = #tpu.core_type<tc>, window_params = [{transform_indices = @transform_0, window_bounds = array<i64: 8, 32>}, {pipeline_mode = #tpu.pipeline_mode<synchronous>, transform_indices = @transform_1, window_bounds = array<i64: 32, 128>}, {pipeline_mode = #tpu.pipeline_mode<synchronous>, transform_indices = @transform_2, window_bounds = array<i64: 1, 128>}, {pipeline_mode = #tpu.pipeline_mode<synchronous>, transform_indices = @transform_3, window_bounds = array<i64: 128, 64>}, {pipeline_mode = #tpu.pipeline_mode<synchronous>, transform_indices = @transform_4, window_bounds = array<i64: 1, 64>}, {pipeline_mode = #tpu.pipeline_mode<synchronous>, transform_indices = @transform_5, window_bounds = array<i64: 64, 32>}, {pipeline_mode = #tpu.pipeline_mode<synchronous>, transform_indices = @transform_6, window_bounds = array<i64: 1, 32>}, {pipeline_mode = #tpu.pipeline_mode<synchronous>, transform_indices = @transform_7, window_bounds = array<i64: 32, 3>}, {pipeline_mode = #tpu.pipeline_mode<synchronous>, transform_indices = @transform_8, window_bounds = array<i64: 1, 3>}, {transform_indices = @transform_9, window_bounds = array<i64: 8, 3>}]} {
    %c0 = arith.constant 0 : index
    %c0_0 = arith.constant 0 : index
    %0 = vector.load %arg1[%c0, %c0_0] : memref<8x32xf32, #tpu.memory_space<vmem>>, vector<8x32xf32>
    %1 = arith.truncf %0 : vector<8x32xf32> to vector<8x32xbf16>
    %c0_1 = arith.constant 0 : index
    %c0_2 = arith.constant 0 : index
    %2 = vector.load %arg2[%c0_1, %c0_2] : memref<32x128xbf16, #tpu.memory_space<vmem>>, vector<32x128xbf16>
    %cst = arith.constant dense<0.000000e+00> : vector<8x128xf32>
    %3 = tpu.matmul %1, %2, %cst {dimension_numbers = #tpu.dot_dimension_numbers<[1], [0], [0], [1], [0, 0, 1, 1], [], []>} : vector<8x32xbf16>, vector<32x128xbf16>, vector<8x128xf32> -> vector<8x128xf32>
    %c0_3 = arith.constant 0 : index
    %c0_4 = arith.constant 0 : index
    %4 = vector.load %arg3[%c0_3, %c0_4] : memref<1x128xf32, #tpu.memory_space<vmem>>, vector<1x128xf32>
    %5 = vector.broadcast %4 : vector<1x128xf32> to vector<8x128xf32>
    %6 = arith.addf %3, %5 : vector<8x128xf32>
    %cst_5 = arith.constant 0.000000e+00 : f32
    %7 = vector.broadcast %cst_5 : f32 to vector<8x128xf32>
    %8 = arith.maximumf %6, %7 : vector<8x128xf32>
    %9 = arith.truncf %8 : vector<8x128xf32> to vector<8x128xbf16>
    %c0_6 = arith.constant 0 : index
    %c0_7 = arith.constant 0 : index
    %10 = vector.load %arg4[%c0_6, %c0_7] : memref<128x64xbf16, #tpu.memory_space<vmem>>, vector<128x64xbf16>
    %cst_8 = arith.constant dense<0.000000e+00> : vector<8x64xf32>
    %11 = tpu.matmul %9, %10, %cst_8 {dimension_numbers = #tpu.dot_dimension_numbers<[1], [0], [0], [1], [0, 0, 1, 1], [], []>} : vector<8x128xbf16>, vector<128x64xbf16>, vector<8x64xf32> -> vector<8x64xf32>
    %c0_9 = arith.constant 0 : index
    %c0_10 = arith.constant 0 : index
    %12 = vector.load %arg5[%c0_9, %c0_10] : memref<1x64xf32, #tpu.memory_space<vmem>>, vector<1x64xf32>
    %13 = vector.broadcast %12 : vector<1x64xf32> to vector<8x64xf32>
    %14 = arith.addf %11, %13 : vector<8x64xf32>
    %cst_11 = arith.constant 0.000000e+00 : f32
    %15 = vector.broadcast %cst_11 : f32 to vector<8x64xf32>
    %16 = arith.maximumf %14, %15 : vector<8x64xf32>
    %17 = arith.truncf %16 : vector<8x64xf32> to vector<8x64xbf16>
    %c0_12 = arith.constant 0 : index
    %c0_13 = arith.constant 0 : index
    %18 = vector.load %arg6[%c0_12, %c0_13] : memref<64x32xbf16, #tpu.memory_space<vmem>>, vector<64x32xbf16>
    %cst_14 = arith.constant dense<0.000000e+00> : vector<8x32xf32>
    %19 = tpu.matmul %17, %18, %cst_14 {dimension_numbers = #tpu.dot_dimension_numbers<[1], [0], [0], [1], [0, 0, 1, 1], [], []>} : vector<8x64xbf16>, vector<64x32xbf16>, vector<8x32xf32> -> vector<8x32xf32>
    %c0_15 = arith.constant 0 : index
    %c0_16 = arith.constant 0 : index
    %20 = vector.load %arg7[%c0_15, %c0_16] : memref<1x32xf32, #tpu.memory_space<vmem>>, vector<1x32xf32>
    %21 = vector.broadcast %20 : vector<1x32xf32> to vector<8x32xf32>
    %22 = arith.addf %19, %21 : vector<8x32xf32>
    %cst_17 = arith.constant 0.000000e+00 : f32
    %23 = vector.broadcast %cst_17 : f32 to vector<8x32xf32>
    %24 = arith.maximumf %22, %23 : vector<8x32xf32>
    %25 = arith.truncf %24 : vector<8x32xf32> to vector<8x32xbf16>
    %c0_18 = arith.constant 0 : index
    %c0_19 = arith.constant 0 : index
    %26 = vector.load %arg8[%c0_18, %c0_19] : memref<32x3xbf16, #tpu.memory_space<vmem>>, vector<32x3xbf16>
    %cst_20 = arith.constant dense<0.000000e+00> : vector<8x3xf32>
    %27 = tpu.matmul %25, %26, %cst_20 {dimension_numbers = #tpu.dot_dimension_numbers<[1], [0], [0], [1], [0, 0, 1, 1], [], []>} : vector<8x32xbf16>, vector<32x3xbf16>, vector<8x3xf32> -> vector<8x3xf32>
    %c0_21 = arith.constant 0 : index
    %c0_22 = arith.constant 0 : index
    %28 = vector.load %arg9[%c0_21, %c0_22] : memref<1x3xf32, #tpu.memory_space<vmem>>, vector<1x3xf32>
    %29 = vector.broadcast %28 : vector<1x3xf32> to vector<8x3xf32>
    %30 = arith.addf %27, %29 : vector<8x3xf32>
    %cst_23 = arith.constant dense<0xFF800000> : vector<8xf32>
    %31 = vector.multi_reduction <maximumf>, %30, %cst_23 [1] : vector<8x3xf32> to vector<8xf32>
    %32 = vector.shape_cast %31 : vector<8xf32> to vector<8x1xf32>
    %33 = vector.broadcast %32 : vector<8x1xf32> to vector<8x3xf32>
    %34 = arith.subf %30, %33 : vector<8x3xf32>
    %35 = math.exp %34 : vector<8x3xf32>
    %cst_24 = arith.constant dense<0.000000e+00> : vector<8xf32>
    %36 = vector.multi_reduction <add>, %35, %cst_24 [1] : vector<8x3xf32> to vector<8xf32>
    %37 = vector.shape_cast %36 : vector<8xf32> to vector<8x1xf32>
    %38 = vector.broadcast %37 : vector<8x1xf32> to vector<8x3xf32>
    %39 = arith.divf %35, %38 : vector<8x3xf32>
    %c0_25 = arith.constant 0 : index
    %c0_26 = arith.constant 0 : index
    %40 = vector.load %arg10[%c0_25, %c0_26] : memref<8x3xf32, #tpu.memory_space<vmem>>, vector<8x3xf32>
    tpu.vector_store %arg10[%c0_25, %c0_26], %39 {strides = array<i32>} : memref<8x3xf32, #tpu.memory_space<vmem>>, vector<8x3xf32>,
    return
  }
  func.func @transform_0(%arg0: i32) -> (i32, i32) {
    %c0_i32 = arith.constant 0 : i32
    %c0_i32_0 = arith.constant 0 : i32
    return %arg0, %c0_i32 : i32, i32
  }
  func.func @transform_1(%arg0: i32) -> (i32, i32) {
    %c0_i32 = arith.constant 0 : i32
    %c0_i32_0 = arith.constant 0 : i32
    %c0_i32_1 = arith.constant 0 : i32
    return %c0_i32, %c0_i32_0 : i32, i32
  }
  func.func @transform_2(%arg0: i32) -> (i32, i32) {
    %c0_i32 = arith.constant 0 : i32
    %c0_i32_0 = arith.constant 0 : i32
    %c0_i32_1 = arith.constant 0 : i32
    return %c0_i32, %c0_i32_0 : i32, i32
  }
  func.func @transform_3(%arg0: i32) -> (i32, i32) {
    %c0_i32 = arith.constant 0 : i32
    %c0_i32_0 = arith.constant 0 : i32
    %c0_i32_1 = arith.constant 0 : i32
    return %c0_i32, %c0_i32_0 : i32, i32
  }
  func.func @transform_4(%arg0: i32) -> (i32, i32) {
    %c0_i32 = arith.constant 0 : i32
    %c0_i32_0 = arith.constant 0 : i32
    %c0_i32_1 = arith.constant 0 : i32
    return %c0_i32, %c0_i32_0 : i32, i32
  }
  func.func @transform_5(%arg0: i32) -> (i32, i32) {
    %c0_i32 = arith.constant 0 : i32
    %c0_i32_0 = arith.constant 0 : i32
    %c0_i32_1 = arith.constant 0 : i32
    return %c0_i32, %c0_i32_0 : i32, i32
  }
  func.func @transform_6(%arg0: i32) -> (i32, i32) {
    %c0_i32 = arith.constant 0 : i32
    %c0_i32_0 = arith.constant 0 : i32
    %c0_i32_1 = arith.constant 0 : i32
    return %c0_i32, %c0_i32_0 : i32, i32
  }
  func.func @transform_7(%arg0: i32) -> (i32, i32) {
    %c0_i32 = arith.constant 0 : i32
    %c0_i32_0 = arith.constant 0 : i32
    %c0_i32_1 = arith.constant 0 : i32
    return %c0_i32, %c0_i32_0 : i32, i32
  }
  func.func @transform_8(%arg0: i32) -> (i32, i32) {
    %c0_i32 = arith.constant 0 : i32
    %c0_i32_0 = arith.constant 0 : i32
    %c0_i32_1 = arith.constant 0 : i32
    return %c0_i32, %c0_i32_0 : i32, i32
  }
  func.func @transform_9(%arg0: i32) -> (i32, i32) {
    %c0_i32 = arith.constant 0 : i32
    %c0_i32_0 = arith.constant 0 : i32
    return %arg0, %c0_i32 : i32, i32
  }
}

</mosaic_0001>

<llo_original>
// kernel: trading_network_forward.1
$region0: #{trading_network_forward.1}
  #allocation0 [shape = 'u32[]', space=smem, size = 0x4, offset = 0x4, fixed_abs, tag = 'smem constant byte address 0x4 - core index']
  #allocation1 [shape = 'u32[144,128]{1,0:T(1,128)}', space=vmem, size = 0x12000, scoped, tag = 'internal scratch']
  %s0 = inlined_call_operand.vmem [shape: f32[8,32], index: 0, kind: input, shape index: {}]
  %s1 = inlined_call_operand.vmem [shape: bf16[32,128], index: 1, kind: input, shape index: {}]
  %s2 = inlined_call_operand.vmem [shape: f32[1,128], index: 2, kind: input, shape index: {}]
  %s3 = inlined_call_operand.vmem [shape: bf16[128,64], index: 3, kind: input, shape index: {}]
  %s4 = inlined_call_operand.vmem [shape: f32[1,64], index: 4, kind: input, shape index: {}]
  %s5 = inlined_call_operand.vmem [shape: bf16[64,32], index: 5, kind: input, shape index: {}]
  %s6 = inlined_call_operand.vmem [shape: f32[1,32], index: 6, kind: input, shape index: {}]
  %s7 = inlined_call_operand.vmem [shape: bf16[32,3], index: 7, kind: input, shape index: {}]
  %s8 = inlined_call_operand.vmem [shape: f32[1,3], index: 8, kind: input, shape index: {}]
  %s9 = inlined_call_operand.vmem [shape: f32[8,3], index: 9, kind: output, shape index: {}]
  %s10 = sld [smem:[#allocation0]]
  $region46: #{trading_network_forward.1} parent=0
    _
  %s12 = ssub.s32 1, %s10
  %s13 = scalar_select 0, %s12, %s10
  // Predicated region
  $region2: #{trading_network_forward.1} parent=0 // pred_check
    _
  $region3: #{trading_network_forward.1} parent=0 // pred_check_branch
    %15 = sbr.rel (0) target = $region5
  $region4: #{trading_network_forward.1} parent=0 // pred_region
    _
  $region5: #{trading_network_forward.1} parent=0 // pred_fallthru
    _
  // Predicated region
  $region6: #{trading_network_forward.1} parent=0 // pred_check
    _
  $region7: #{trading_network_forward.1} parent=0 // pred_check_branch
    %17 = sbr.rel (0) target = $region9
  $region8: #{trading_network_forward.1} parent=0 // pred_region
    _
  $region9: #{trading_network_forward.1} parent=0 // pred_fallthru
    _
  // Predicated region
  $region10: #{trading_network_forward.1} parent=0 // pred_check
    _
  $region11: #{trading_network_forward.1} parent=0 // pred_check_branch
    %19 = sbr.rel (0) target = $region13
  $region12: #{trading_network_forward.1} parent=0 // pred_region
    _
  $region13: #{trading_network_forward.1} parent=0 // pred_fallthru
    _
  // Predicated region
  $region14: #{trading_network_forward.1} parent=0 // pred_check
    _
  $region15: #{trading_network_forward.1} parent=0 // pred_check_branch
    %21 = sbr.rel (0) target = $region17
  $region16: #{trading_network_forward.1} parent=0 // pred_region
    _
  $region17: #{trading_network_forward.1} parent=0 // pred_fallthru
    _
  // Predicated region
  $region18: #{trading_network_forward.1} parent=0 // pred_check
    _
  $region19: #{trading_network_forward.1} parent=0 // pred_check_branch
    %23 = sbr.rel (0) target = $region21
  $region20: #{trading_network_forward.1} parent=0 // pred_region
    _
  $region21: #{trading_network_forward.1} parent=0 // pred_fallthru
    _
  // Predicated region
  $region22: #{trading_network_forward.1} parent=0 // pred_check
    _
  $region23: #{trading_network_forward.1} parent=0 // pred_check_branch
    %25 = sbr.rel (0) target = $region25
  $region24: #{trading_network_forward.1} parent=0 // pred_region
    _
  $region25: #{trading_network_forward.1} parent=0 // pred_fallthru
    _
  // Predicated region
  $region26: #{trading_network_forward.1} parent=0 // pred_check
    _
  $region27: #{trading_network_forward.1} parent=0 // pred_check_branch
    %27 = sbr.rel (0) target = $region29
  $region28: #{trading_network_forward.1} parent=0 // pred_region
    _
  $region29: #{trading_network_forward.1} parent=0 // pred_fallthru
    _
  // Predicated region
  $region30: #{trading_network_forward.1} parent=0 // pred_check
    _
  $region31: #{trading_network_forward.1} parent=0 // pred_check_branch
    %29 = sbr.rel (0) target = $region33
  $region32: #{trading_network_forward.1} parent=0 // pred_region
    _
  $region33: #{trading_network_forward.1} parent=0 // pred_fallthru
    _
  // Predicated region
  $region34: #{trading_network_forward.1} parent=0 // pred_check
    _
  $region35: #{trading_network_forward.1} parent=0 // pred_check_branch
    %31 = sbr.rel (0) target = $region37
  $region36: #{trading_network_forward.1} parent=0 // pred_region
    _
  $region37: #{trading_network_forward.1} parent=0 // pred_fallthru
    _
  %v33 = vld [vmem:[%s0] sm:$0xff]
  %v34 = vpack.c.bf16 %v33, %v33
  %v35 = vld [vmem:[%s1] sm:$0xf]
  %v36 = vld [vmem:[%s1 + $0x4] sm:$0xf]
  %v37 = vld [vmem:[%s1 + $0x8] sm:$0xf]
  %v38 = vld [vmem:[%s1 + $0xc] sm:$0xf]
  %v39 = vld [vmem:[%s2] sm:$0x1]
  %v41 = vlaneseq
  %v42 = vshrl.u32 %v41, 7
  %v43 = vsub.s32 0, %v42
  %v44 = vrot.slane %v39, %v43
  %v50 = vunpack.c.l.b16 %v35
  %v51 = vunpack.c.l.b16 %v36
  %v52 = vunpack.c.l.b16 %v37
  %v53 = vunpack.c.l.b16 %v38
  %v54 = vpack.c.b16 %v51, %v50
  %v55 = vpack.c.b16 %v53, %v52
  %vm58 = vcmask 261120
  %v60 = vsel %vm58, %v34, 0
  %62 = vmatprep.subr.bf16.mxu0 0
  %63 = vmatpush1.bf16.msra.mxu0 %v54
  %64 = vmatprep.subr.bf16.mxu0 0
  %65 = vmatpush1.bf16.msra.mxu0 %v55
  %66 = vmatprep.subr.bf16.mxu0 0
  %67 = vmatpush1.bf16.msra.mxu0 0
  %68 = vmatprep.subr.bf16.mxu0 0
  %69 = vmatpush1.bf16.msra.mxu0 0
  %70 = vmatprep.subr.bf16.mxu0 0
  %71 = vmatpush1.bf16.msra.mxu0 0
  %72 = vmatprep.subr.bf16.mxu0 0
  %73 = vmatpush1.bf16.msra.mxu0 0
  %74 = vmatprep.subr.bf16.mxu0 0
  %75 = vmatpush1.bf16.msra.mxu0 0
  %76 = vmatprep.subr.bf16.mxu0 0
  %77 = vmatpush1.bf16.msra.mxu0 0
  %78 = vmatprep.subr.bf16.mxu0 0
  %79 = vmatpush1.bf16.msra.mxu0 0
  %80 = vmatprep.subr.bf16.mxu0 0
  %81 = vmatpush1.bf16.msra.mxu0 0
  %82 = vmatprep.subr.bf16.mxu0 0
  %83 = vmatpush1.bf16.msra.mxu0 0
  %84 = vmatprep.subr.bf16.mxu0 0
  %85 = vmatpush1.bf16.msra.mxu0 0
  %86 = vmatprep.subr.bf16.mxu0 0
  %87 = vmatpush1.bf16.msra.mxu0 0
  %88 = vmatprep.subr.bf16.mxu0 0
  %89 = vmatpush1.bf16.msra.mxu0 0
  %90 = vmatprep.subr.bf16.mxu0 0
  %91 = vmatpush1.bf16.msra.mxu0 0
  %92 = vmatprep.subr.bf16.mxu0 0
  %93 = vmatpush1.bf16.msra.mxu0 0
  %94 = vmatprep.mubr.bf16.mxu0 0
  %95 = vmatmul.mubr.bf16.gmra.mrb[0].mxu0 %v60
  %v96 = vpop.f32.mrb[0].mxu0
  %v97 = vadd.f32 %v44, %v96
  %v98 = vpop.f32.mrb[0].mxu0
  %v99 = vpop.f32.mrb[0].mxu0
  %v100 = vpop.f32.mrb[0].mxu0
  %101 = vdwg.mxu0
  %v102 = vmax.f32 %v97, 0.0
  %v103 = vpack.c.bf16 %v102, %v102
  %v104 = vld [vmem:[%s3] sm:$0xf]
  %v105 = vld [vmem:[%s3 + $0x4] sm:$0xf]
  %v106 = vld [vmem:[%s3 + $0x8] sm:$0xf]
  %v107 = vld [vmem:[%s3 + $0xc] sm:$0xf]
  %v108 = vld [vmem:[%s3 + $0x10] sm:$0xf]
  %v109 = vld [vmem:[%s3 + $0x14] sm:$0xf]
  %v110 = vld [vmem:[%s3 + $0x18] sm:$0xf]
  %v111 = vld [vmem:[%s3 + $0x1c] sm:$0xf]
  %v112 = vld [vmem:[%s3 + $0x20] sm:$0xf]
  %v113 = vld [vmem:[%s3 + $0x24] sm:$0xf]
  %v114 = vld [vmem:[%s3 + $0x28] sm:$0xf]
  %v115 = vld [vmem:[%s3 + $0x2c] sm:$0xf]
  %v116 = vld [vmem:[%s3 + $0x30] sm:$0xf]
  %v117 = vld [vmem:[%s3 + $0x34] sm:$0xf]
  %v118 = vld [vmem:[%s3 + $0x38] sm:$0xf]
  %v119 = vld [vmem:[%s3 + $0x3c] sm:$0xf]
  %v120 = vld [vmem:[%s4] sm:$0x1]
  %v122 = vlaneseq
  %v123 = vshrl.u32 %v122, 7
  %v124 = vsub.s32 0, %v123
  %v125 = vrot.slane %v120, %v124
  %v143 = vunpack.c.l.b16 %v104
  %v144 = vunpack.c.l.b16 %v105
  %v145 = vunpack.c.l.b16 %v106
  %v146 = vunpack.c.l.b16 %v107
  %v147 = vunpack.c.l.b16 %v108
  %v148 = vunpack.c.l.b16 %v109
  %v149 = vunpack.c.l.b16 %v110
  %v150 = vunpack.c.l.b16 %v111
  %v151 = vunpack.c.l.b16 %v112
  %v152 = vunpack.c.l.b16 %v113
  %v153 = vunpack.c.l.b16 %v114
  %v154 = vunpack.c.l.b16 %v115
  %v155 = vunpack.c.l.b16 %v116
  %v156 = vunpack.c.l.b16 %v117
  %v157 = vunpack.c.l.b16 %v118
  %v158 = vunpack.c.l.b16 %v119
  %v159 = vpack.c.b16 %v144, %v143
  %v160 = vpack.c.b16 %v146, %v145
  %v161 = vpack.c.b16 %v148, %v147
  %v162 = vpack.c.b16 %v150, %v149
  %v163 = vpack.c.b16 %v152, %v151
  %v164 = vpack.c.b16 %v154, %v153
  %v165 = vpack.c.b16 %v156, %v155
  %v166 = vpack.c.b16 %v158, %v157
  %175 = vmatprep.subr.bf16.mxu0 0
  %176 = vmatpush1.bf16.msra.mxu0 %v159
  %177 = vmatprep.subr.bf16.mxu0 0
  %178 = vmatpush1.bf16.msra.mxu0 %v160
  %179 = vmatprep.subr.bf16.mxu0 0
  %180 = vmatpush1.bf16.msra.mxu0 %v161
  %181 = vmatprep.subr.bf16.mxu0 0
  %182 = vmatpush1.bf16.msra.mxu0 %v162
  %183 = vmatprep.subr.bf16.mxu0 0
  %184 = vmatpush1.bf16.msra.mxu0 %v163
  %185 = vmatprep.subr.bf16.mxu0 0
  %186 = vmatpush1.bf16.msra.mxu0 %v164
  %187 = vmatprep.subr.bf16.mxu0 0
  %188 = vmatpush1.bf16.msra.mxu0 %v165
  %189 = vmatprep.subr.bf16.mxu0 0
  %190 = vmatpush1.bf16.msra.mxu0 %v166
  %191 = vmatprep.subr.bf16.mxu0 0
  %192 = vmatpush1.bf16.msra.mxu0 0
  %193 = vmatprep.subr.bf16.mxu0 0
  %194 = vmatpush1.bf16.msra.mxu0 0
  %195 = vmatprep.subr.bf16.mxu0 0
  %196 = vmatpush1.bf16.msra.mxu0 0
  %197 = vmatprep.subr.bf16.mxu0 0
  %198 = vmatpush1.bf16.msra.mxu0 0
  %199 = vmatprep.subr.bf16.mxu0 0
  %200 = vmatpush1.bf16.msra.mxu0 0
  %201 = vmatprep.subr.bf16.mxu0 0
  %202 = vmatpush1.bf16.msra.mxu0 0
  %203 = vmatprep.subr.bf16.mxu0 0
  %204 = vmatpush1.bf16.msra.mxu0 0
  %205 = vmatprep.subr.bf16.mxu0 0
  %206 = vmatpush1.bf16.msra.mxu0 0
  %207 = vmatprep.mubr.bf16.mxu0 0
  %208 = vmatmul.mubr.bf16.gmra.mrb[0].mxu0 %v103
  %v209 = vpop.f32.mrb[0].mxu0
  %v210 = vadd.f32 %v125, %v209
  %v211 = vpop.f32.mrb[0].mxu0
  %v212 = vpop.f32.mrb[0].mxu0
  %v213 = vpop.f32.mrb[0].mxu0
  %214 = vdwg.mxu0
  %v215 = vmax.f32 %v210, 0.0
  %v216 = vpack.c.bf16 %v215, %v215
  %v217 = vld [vmem:[%s5] sm:$0xf]
  %v218 = vld [vmem:[%s5 + $0x4] sm:$0xf]
  %v219 = vld [vmem:[%s5 + $0x8] sm:$0xf]
  %v220 = vld [vmem:[%s5 + $0xc] sm:$0xf]
  %v221 = vld [vmem:[%s5 + $0x10] sm:$0xf]
  %v222 = vld [vmem:[%s5 + $0x14] sm:$0xf]
  %v223 = vld [vmem:[%s5 + $0x18] sm:$0xf]
  %v224 = vld [vmem:[%s5 + $0x1c] sm:$0xf]
  %v225 = vld [vmem:[%s6] sm:$0x1]
  %v227 = vlaneseq
  %v228 = vshrl.u32 %v227, 7
  %v229 = vsub.s32 0, %v228
  %v230 = vrot.slane %v225, %v229
  %v240 = vunpack.c.l.b16 %v217
  %v241 = vunpack.c.l.b16 %v218
  %v242 = vunpack.c.l.b16 %v219
  %v243 = vunpack.c.l.b16 %v220
  %v244 = vunpack.c.l.b16 %v221
  %v245 = vunpack.c.l.b16 %v222
  %v246 = vunpack.c.l.b16 %v223
  %v247 = vunpack.c.l.b16 %v224
  %v248 = vpack.c.b16 %v241, %v240
  %v249 = vpack.c.b16 %v243, %v242
  %v250 = vpack.c.b16 %v245, %v244
  %v251 = vpack.c.b16 %v247, %v246
  %vm256 = vcmask 523264
  %v258 = vsel %vm256, %v216, 0
  %260 = vmatprep.subr.bf16.mxu0 0
  %261 = vmatpush1.bf16.msra.mxu0 %v248
  %262 = vmatprep.subr.bf16.mxu0 0
  %263 = vmatpush1.bf16.msra.mxu0 %v249
  %264 = vmatprep.subr.bf16.mxu0 0
  %265 = vmatpush1.bf16.msra.mxu0 %v250
  %266 = vmatprep.subr.bf16.mxu0 0
  %267 = vmatpush1.bf16.msra.mxu0 %v251
  %268 = vmatprep.subr.bf16.mxu0 0
  %269 = vmatpush1.bf16.msra.mxu0 0
  %270 = vmatprep.subr.bf16.mxu0 0
  %271 = vmatpush1.bf16.msra.mxu0 0
  %272 = vmatprep.subr.bf16.mxu0 0
  %273 = vmatpush1.bf16.msra.mxu0 0
  %274 = vmatprep.subr.bf16.mxu0 0
  %275 = vmatpush1.bf16.msra.mxu0 0
  %276 = vmatprep.subr.bf16.mxu0 0
  %277 = vmatpush1.bf16.msra.mxu0 0
  %278 = vmatprep.subr.bf16.mxu0 0
  %279 = vmatpush1.bf16.msra.mxu0 0
  %280 = vmatprep.subr.bf16.mxu0 0
  %281 = vmatpush1.bf16.msra.mxu0 0
  %282 = vmatprep.subr.bf16.mxu0 0
  %283 = vmatpush1.bf16.msra.mxu0 0
  %284 = vmatprep.subr.bf16.mxu0 0
  %285 = vmatpush1.bf16.msra.mxu0 0
  %286 = vmatprep.subr.bf16.mxu0 0
  %287 = vmatpush1.bf16.msra.mxu0 0
  %288 = vmatprep.subr.bf16.mxu0 0
  %289 = vmatpush1.bf16.msra.mxu0 0
  %290 = vmatprep.subr.bf16.mxu0 0
  %291 = vmatpush1.bf16.msra.mxu0 0
  %292 = vmatprep.mubr.bf16.mxu0 0
  %293 = vmatmul.mubr.bf16.gmra.mrb[0].mxu0 %v258
  %v294 = vpop.f32.mrb[0].mxu0
  %v295 = vadd.f32 %v230, %v294
  %v296 = vpop.f32.mrb[0].mxu0
  %v297 = vpop.f32.mrb[0].mxu0
  %v298 = vpop.f32.mrb[0].mxu0
  %299 = vdwg.mxu0
  %v300 = vmax.f32 %v295, 0.0
  %v301 = vpack.c.bf16 %v300, %v300
  %v302 = vld [vmem:[%s7] sm:$0xf]
  %v303 = vld [vmem:[%s7 + $0x4] sm:$0xf]
  %v304 = vld [vmem:[%s7 + $0x8] sm:$0xf]
  %v305 = vld [vmem:[%s7 + $0xc] sm:$0xf]
  %v306 = vld [vmem:[%s8] sm:$0x1]
  %v308 = vlaneseq
  %v309 = vshrl.u32 %v308, 7
  %v310 = vsub.s32 0, %v309
  %v311 = vrot.slane %v306, %v310
  %v317 = vunpack.c.l.b16 %v302
  %v318 = vunpack.c.l.b16 %v303
  %v319 = vunpack.c.l.b16 %v304
  %v320 = vunpack.c.l.b16 %v305
  %v321 = vpack.c.b16 %v318, %v317
  %v322 = vpack.c.b16 %v320, %v319
  %v326 = vsel %vm58, %v301, 0
  %328 = vmatprep.subr.bf16.mxu0 0
  %329 = vmatpush1.bf16.msra.mxu0 %v321
  %330 = vmatprep.subr.bf16.mxu0 0
  %331 = vmatpush1.bf16.msra.mxu0 %v322
  %332 = vmatprep.subr.bf16.mxu0 0
  %333 = vmatpush1.bf16.msra.mxu0 0
  %334 = vmatprep.subr.bf16.mxu0 0
  %335 = vmatpush1.bf16.msra.mxu0 0
  %336 = vmatprep.subr.bf16.mxu0 0
  %337 = vmatpush1.bf16.msra.mxu0 0
  %338 = vmatprep.subr.bf16.mxu0 0
  %339 = vmatpush1.bf16.msra.mxu0 0
  %340 = vmatprep.subr.bf16.mxu0 0
  %341 = vmatpush1.bf16.msra.mxu0 0
  %342 = vmatprep.subr.bf16.mxu0 0
  %343 = vmatpush1.bf16.msra.mxu0 0
  %344 = vmatprep.subr.bf16.mxu0 0
  %345 = vmatpush1.bf16.msra.mxu0 0
  %346 = vmatprep.subr.bf16.mxu0 0
  %347 = vmatpush1.bf16.msra.mxu0 0
  %348 = vmatprep.subr.bf16.mxu0 0
  %349 = vmatpush1.bf16.msra.mxu0 0
  %350 = vmatprep.subr.bf16.mxu0 0
  %351 = vmatpush1.bf16.msra.mxu0 0
  %352 = vmatprep.subr.bf16.mxu0 0
  %353 = vmatpush1.bf16.msra.mxu0 0
  %354 = vmatprep.subr.bf16.mxu0 0
  %355 = vmatpush1.bf16.msra.mxu0 0
  %356 = vmatprep.subr.bf16.mxu0 0
  %357 = vmatpush1.bf16.msra.mxu0 0
  %358 = vmatprep.subr.bf16.mxu0 0
  %359 = vmatpush1.bf16.msra.mxu0 0
  %360 = vmatprep.mubr.bf16.mxu0 0
  %361 = vmatmul.mubr.bf16.gmra.mrb[0].mxu0 %v326
  %v362 = vpop.f32.mrb[0].mxu0
  %v363 = vadd.f32 %v311, %v362
  %v364 = vpop.f32.mrb[0].mxu0
  %v365 = vpop.f32.mrb[0].mxu0
  %v366 = vpop.f32.mrb[0].mxu0
  %367 = vdwg.mxu0
  %vm368 = vcmask 23552
  %v369 = vsel %vm368, %v363, -inf
  %370 = vmax.xlane.f32.xlu0 %v369
  %v371 = vpop.xlane.xlu0 %370
  %v372 = vsub.f32 %v363, %v371
  %v373 = vmul.f32 %v372, 1.442695
  %v374 = vpow.pop %v373
  %v375 = vsel %vm368, %v374, 0.0
  %376 = vadd.xlane.f32.xlu0 %v375
  %v377 = vpop.xlane.xlu0 %376
  %v378 = vrcp.pop %v377
  %v379 = vmul.f32 %v374, %v378
  %380 = vst.msk [vmem:[%s9] sm:$0xff] %vm368, %v379
  // Predicated region
  $region38: #{trading_network_forward.1} parent=0 // pred_check
    _
  $region39: #{trading_network_forward.1} parent=0 // pred_check_branch
    %382 = sbr.rel (0) target = $region41
  $region40: #{trading_network_forward.1} parent=0 // pred_region
    _
  $region41: #{trading_network_forward.1} parent=0 // pred_fallthru
    _
  // Predicated region
  $region42: #{trading_network_forward.1} parent=0 // pred_check
    _
  $region43: #{trading_network_forward.1} parent=0 // pred_check_branch
    %384 = sbr.rel (0) target = $region45
  $region44: #{trading_network_forward.1} parent=0 // pred_region
    _
  $region45: #{trading_network_forward.1} parent=0 // pred_fallthru
    _

</llo_original>
